<compile_context>
chip_gen: v5e
topology: v5e:2x2
jax: 0.10.0
libtpu: 0.0.40
codegen_flags: <defaults>
</compile_context>

<pallas_src>
import functools

import jax
import jax.numpy as jnp
from jax.experimental import pallas as pl
from jax.experimental.pallas import tpu as pltpu


def _round_up(a, b):
    return (a + b - 1) // b * b


def _triu_pairs(d):
    # Row-major upper-triangular index pairs, matching torch's boolean-mask ordering.
    return tuple((i, j) for i in range(d) for j in range(i, d))


def _llgmn_kernel(x_ref, w_ref, sel_ref, o_ref, phi_ref, *, pairs):
    """Lane-major (batch-on-lanes) LLGMN forward for one tile of T samples.

    x_ref:   (D, T)   transposed inputs
    w_ref:   (CM, H)  transposed flattened weight (redundant row pre-zeroed)
    sel_ref: (C, CM)  component-sum selector
    o_ref:   (C, T)   per-class posteriors (lane-dense output block)
    phi_ref: (H, T)   VMEM scratch for the nonlinear feature block
    All f32; T is a multiple of 128.
    """
    xT = x_ref[...]                                    # (D, T)
    d, t = xT.shape

    # Nonlinear feature block phi = [1; x; x_i * x_j (i<=j)], batch on lanes.
    phi_ref[0:1, :] = jnp.ones((1, t), dtype=jnp.float32)
    phi_ref[1:1 + d, :] = xT
    xrows = [xT[i:i + 1, :] for i in range(d)]         # d sublane extracts, reused
    for k, (i, j) in enumerate(pairs):
        phi_ref[1 + d + k:2 + d + k, :] = xrows[i] * xrows[j]

    # I2 = W^T @ phi : bias + linear + quadratic fused into ONE MXU matmul.
    # The redundant (class, component) row of w_ref is pre-zeroed by the wrapper,
    # so i2[-1, :] == 0 as in redundant_term_to_zero().
    i2 = jnp.dot(w_ref[...], phi_ref[...],
                 preferred_element_type=jnp.float32)   # (CM, T)

    # Stabilized softmax over the flattened (class, component) axis (sublanes).
    m = jnp.max(i2, axis=0, keepdims=True)             # (1, T)
    e = jnp.exp(i2 - m)                                # (CM, T)
    denom = jnp.sum(e, axis=0, keepdims=True)          # (1, T)

    # Per-class numerator via a tiny (C, CM) @ (CM, T) matmul, then one EXACT divide
    # on the (C, T) result (rows sum to 1 up to fp32 rounding -> fixes prior assert).
    num = jnp.dot(sel_ref[...], e, preferred_element_type=jnp.float32)  # (C, T)
    o_ref[...] = num / denom


def llgmn_forward(x, weight, n_class, n_component, tile_n=8192):
    n, d = x.shape
    h = weight.shape[0]
    assert h == 1 + d * (d + 3) // 2
    cm = n_class * n_component

    # Fold the redundant-term zeroing into the weight (exact for the forward pass:
    # I2[:, -1] = xn @ w2[:, -1]).
    # TODO(synk): if a backward pass is added, the gradient of this weight column must
    # still be masked as in the original module.
    w2 = weight.reshape(h, cm).astype(jnp.float32)
    w2 = w2.at[:, -1].set(0.0)
    wT = w2.T                                          # (CM, H)

    # Component-sum selector: sel[c, j] = 1 iff j // n_component == c.
    sel = (jnp.arange(n_class)[:, None] ==
           (jnp.arange(cm)[None, :] // n_component)).astype(jnp.float32)  # (C, CM)

    # Lane-major layout: batch on lanes. Pad batch to a multiple of the (128-aligned) tile.
    tile = min(_round_up(tile_n, 128), _round_up(n, 128))
    n_pad = _round_up(n, tile)
    xf = x.astype(jnp.float32)
    if n_pad != n:
        xf = jnp.pad(xf, ((0, n_pad - n), (0, 0)))     # zero rows: harmless, sliced off
    xT = xf.T                                          # (D, n_pad)

    kernel = functools.partial(_llgmn_kernel, pairs=_triu_pairs(d))
    outT = pl.pallas_call(
        kernel,
        out_shape=jax.ShapeDtypeStruct((n_class, n_pad), jnp.float32),
        grid=(n_pad // tile,),
        in_specs=[
            pl.BlockSpec((d, tile), lambda i: (0, i)),        # x^T: batch-tiled, pipelined
            pl.BlockSpec((cm, h), lambda i: (0, 0)),          # grid-invariant weight
            pl.BlockSpec((n_class, cm), lambda i: (0, 0)),    # grid-invariant selector
        ],
        out_specs=pl.BlockSpec((n_class, tile), lambda i: (0, i)),  # lane-dense output
        scratch_shapes=[pltpu.VMEM((h, tile), jnp.float32)],  # (H, tile) feature block
        # TODO(synk): sweep pltpu.CORE_PARALLEL / an explicit 2-way leading axis on v7x
        # to confirm the 2-TensorCore split; "parallel" is the portable default.
        compiler_params=pltpu.CompilerParams(
            dimension_semantics=("parallel",)),
    )(xT, wT, sel)
    return outT.T[:n]


# ---------------- pure-JAX reference mirroring the PyTorch forward ----------------

def nonlinear_trans_ref(x, in_features):
    if in_features == 1:
        quad = x * x
    else:
        outer = jnp.einsum('ni,nj->nij', x, x)
        iu_r, iu_c = jnp.triu_indices(in_features)
        quad = outer[:, iu_r, iu_c]
    bias = jnp.ones((x.shape[0], 1), dtype=x.dtype)
    return jnp.concatenate([bias, x, quad], axis=1)


def llgmn_reference(x, weight, n_class, n_component):
    d = x.shape[1]
    xn = nonlinear_trans_ref(x.astype(jnp.float32), d)
    i2 = jnp.einsum('ni,icm->ncm', xn, weight.astype(jnp.float32))
    i2 = i2.reshape(x.shape[0], -1).at[:, -1].set(0.0)
    e = jnp.exp(i2)
    denom = jnp.sum(e, axis=1, keepdims=True)
    o2 = (e / denom).reshape(x.shape[0], n_class, n_component)
    return jnp.sum(o2, axis=2)


if __name__ == "__main__":
    batch, in_features, n_class, n_component = 8, 4, 3, 2
    H = 1 + in_features * (in_features + 3) // 2   # 15

    key = jax.random.PRNGKey(0)
    kx, kw, kx2 = jax.random.split(key, 3)

    # Xavier-uniform-like init, then zero the redundant weight as in reset_parameters().
    fan_in = n_class * n_component
    fan_out = H * n_component
    bound = (6.0 / (fan_in + fan_out)) ** 0.5
    weight = jax.random.uniform(kw, (H, n_class, n_component),
                                minval=-bound, maxval=bound, dtype=jnp.float32)
    weight = weight.at[:, n_class - 1, n_component - 1].set(0.0)

    x = jax.random.normal(kx, (batch, in_features), dtype=jnp.float32)

    out = jax.block_until_ready(llgmn_forward(x, weight, n_class, n_component))
    ref = llgmn_reference(x, weight, n_class, n_component)
    assert out.shape == (batch, n_class)
    assert jnp.allclose(out, ref, atol=1e-4, rtol=1e-4), (out, ref)
    # Exact divide -> rows sum to 1 up to fp32 rounding.
    assert jnp.allclose(jnp.sum(out, axis=1), 1.0, atol=1e-4)

    # Larger batch, not a multiple of the tile: exercises the multi-step pipelined grid
    # and the pad/transpose/slice path.
    x2 = jax.random.normal(kx2, (2000, in_features), dtype=jnp.float32)
    out2 = jax.block_until_ready(
        llgmn_forward(x2, weight, n_class, n_component, tile_n=512))
    ref2 = llgmn_reference(x2, weight, n_class, n_component)
    assert out2.shape == (2000, n_class)
    assert jnp.allclose(out2, ref2, atol=1e-4, rtol=1e-4)
    assert jnp.allclose(jnp.sum(out2, axis=1), 1.0, atol=1e-4)

    print("KERNEL_OK")
</pallas_src>

<mosaic_0001>
module attributes {stable_mosaic.version = 11 : i64} {
  func.func @_llgmn_kernel(%arg0: i32, %arg1: memref<4x128xf32, #tpu.memory_space<vmem>>, %arg2: memref<6x15xf32, #tpu.memory_space<vmem>>, %arg3: memref<3x6xf32, #tpu.memory_space<vmem>>, %arg4: memref<3x128xf32, #tpu.memory_space<vmem>>, %arg5: memref<15x128xf32, #tpu.memory_space<vmem>>) attributes {dimension_semantics = [#tpu.dimension_semantics<parallel>], iteration_bounds = array<i64: 1>, scalar_prefetch = 0 : i64, scratch_operands = 1 : i64, tpu.core_type = #tpu.core_type<tc>, window_params = [{transform_indices = @transform_0, window_bounds = array<i64: 4, 128>}, {pipeline_mode = #tpu.pipeline_mode<synchronous>, transform_indices = @transform_1, window_bounds = array<i64: 6, 15>}, {pipeline_mode = #tpu.pipeline_mode<synchronous>, transform_indices = @transform_2, window_bounds = array<i64: 3, 6>}, {transform_indices = @transform_3, window_bounds = array<i64: 3, 128>}]} {
    %c0 = arith.constant 0 : index
    %c0_0 = arith.constant 0 : index
    %0 = vector.load %arg1[%c0, %c0_0] : memref<4x128xf32, #tpu.memory_space<vmem>>, vector<4x128xf32>
    %cst = arith.constant 1.000000e+00 : f32
    %1 = vector.broadcast %cst : f32 to vector<1x128xf32>
    %c0_1 = arith.constant 0 : index
    %c0_2 = arith.constant 0 : index
    %2 = vector.load %arg5[%c0_1, %c0_2] : memref<15x128xf32, #tpu.memory_space<vmem>>, vector<1x128xf32>
    tpu.vector_store %arg5[%c0_1, %c0_2], %1 {strides = array<i32>} : memref<15x128xf32, #tpu.memory_space<vmem>>, vector<1x128xf32>,
    %c1 = arith.constant 1 : index
    %c0_3 = arith.constant 0 : index
    %3 = vector.load %arg5[%c1, %c0_3] : memref<15x128xf32, #tpu.memory_space<vmem>>, vector<4x128xf32>
    tpu.vector_store %arg5[%c1, %c0_3], %0 {strides = array<i32>} : memref<15x128xf32, #tpu.memory_space<vmem>>, vector<4x128xf32>,
    %4 = vector.extract_strided_slice %0 {offsets = [0, 0], sizes = [1, 128], strides = [1, 1]} : vector<4x128xf32> to vector<1x128xf32>
    %5 = vector.extract_strided_slice %0 {offsets = [1, 0], sizes = [1, 128], strides = [1, 1]} : vector<4x128xf32> to vector<1x128xf32>
    %6 = vector.extract_strided_slice %0 {offsets = [2, 0], sizes = [1, 128], strides = [1, 1]} : vector<4x128xf32> to vector<1x128xf32>
    %7 = vector.extract_strided_slice %0 {offsets = [3, 0], sizes = [1, 128], strides = [1, 1]} : vector<4x128xf32> to vector<1x128xf32>
    %8 = arith.mulf %4, %4 : vector<1x128xf32>
    %c5 = arith.constant 5 : index
    %c0_4 = arith.constant 0 : index
    %9 = vector.load %arg5[%c5, %c0_4] : memref<15x128xf32, #tpu.memory_space<vmem>>, vector<1x128xf32>
    tpu.vector_store %arg5[%c5, %c0_4], %8 {strides = array<i32>} : memref<15x128xf32, #tpu.memory_space<vmem>>, vector<1x128xf32>,
    %10 = arith.mulf %4, %5 : vector<1x128xf32>
    %c6 = arith.constant 6 : index
    %c0_5 = arith.constant 0 : index
    %11 = vector.load %arg5[%c6, %c0_5] : memref<15x128xf32, #tpu.memory_space<vmem>>, vector<1x128xf32>
    tpu.vector_store %arg5[%c6, %c0_5], %10 {strides = array<i32>} : memref<15x128xf32, #tpu.memory_space<vmem>>, vector<1x128xf32>,
    %12 = arith.mulf %4, %6 : vector<1x128xf32>
    %c7 = arith.constant 7 : index
    %c0_6 = arith.constant 0 : index
    %13 = vector.load %arg5[%c7, %c0_6] : memref<15x128xf32, #tpu.memory_space<vmem>>, vector<1x128xf32>
    tpu.vector_store %arg5[%c7, %c0_6], %12 {strides = array<i32>} : memref<15x128xf32, #tpu.memory_space<vmem>>, vector<1x128xf32>,
    %14 = arith.mulf %4, %7 : vector<1x128xf32>
    %c8 = arith.constant 8 : index
    %c0_7 = arith.constant 0 : index
    %15 = vector.load %arg5[%c8, %c0_7] : memref<15x128xf32, #tpu.memory_space<vmem>>, vector<1x128xf32>
    tpu.vector_store %arg5[%c8, %c0_7], %14 {strides = array<i32>} : memref<15x128xf32, #tpu.memory_space<vmem>>, vector<1x128xf32>,
    %16 = arith.mulf %5, %5 : vector<1x128xf32>
    %c9 = arith.constant 9 : index
    %c0_8 = arith.constant 0 : index
    %17 = vector.load %arg5[%c9, %c0_8] : memref<15x128xf32, #tpu.memory_space<vmem>>, vector<1x128xf32>
    tpu.vector_store %arg5[%c9, %c0_8], %16 {strides = array<i32>} : memref<15x128xf32, #tpu.memory_space<vmem>>, vector<1x128xf32>,
    %18 = arith.mulf %5, %6 : vector<1x128xf32>
    %c10 = arith.constant 10 : index
    %c0_9 = arith.constant 0 : index
    %19 = vector.load %arg5[%c10, %c0_9] : memref<15x128xf32, #tpu.memory_space<vmem>>, vector<1x128xf32>
    tpu.vector_store %arg5[%c10, %c0_9], %18 {strides = array<i32>} : memref<15x128xf32, #tpu.memory_space<vmem>>, vector<1x128xf32>,
    %20 = arith.mulf %5, %7 : vector<1x128xf32>
    %c11 = arith.constant 11 : index
    %c0_10 = arith.constant 0 : index
    %21 = vector.load %arg5[%c11, %c0_10] : memref<15x128xf32, #tpu.memory_space<vmem>>, vector<1x128xf32>
    tpu.vector_store %arg5[%c11, %c0_10], %20 {strides = array<i32>} : memref<15x128xf32, #tpu.memory_space<vmem>>, vector<1x128xf32>,
    %22 = arith.mulf %6, %6 : vector<1x128xf32>
    %c12 = arith.constant 12 : index
    %c0_11 = arith.constant 0 : index
    %23 = vector.load %arg5[%c12, %c0_11] : memref<15x128xf32, #tpu.memory_space<vmem>>, vector<1x128xf32>
    tpu.vector_store %arg5[%c12, %c0_11], %22 {strides = array<i32>} : memref<15x128xf32, #tpu.memory_space<vmem>>, vector<1x128xf32>,
    %24 = arith.mulf %6, %7 : vector<1x128xf32>
    %c13 = arith.constant 13 : index
    %c0_12 = arith.constant 0 : index
    %25 = vector.load %arg5[%c13, %c0_12] : memref<15x128xf32, #tpu.memory_space<vmem>>, vector<1x128xf32>
    tpu.vector_store %arg5[%c13, %c0_12], %24 {strides = array<i32>} : memref<15x128xf32, #tpu.memory_space<vmem>>, vector<1x128xf32>,
    %26 = arith.mulf %7, %7 : vector<1x128xf32>
    %c14 = arith.constant 14 : index
    %c0_13 = arith.constant 0 : index
    %27 = vector.load %arg5[%c14, %c0_13] : memref<15x128xf32, #tpu.memory_space<vmem>>, vector<1x128xf32>
    tpu.vector_store %arg5[%c14, %c0_13], %26 {strides = array<i32>} : memref<15x128xf32, #tpu.memory_space<vmem>>, vector<1x128xf32>,
    %c0_14 = arith.constant 0 : index
    %c0_15 = arith.constant 0 : index
    %28 = vector.load %arg2[%c0_14, %c0_15] : memref<6x15xf32, #tpu.memory_space<vmem>>, vector<6x15xf32>
    %c0_16 = arith.constant 0 : index
    %c0_17 = arith.constant 0 : index
    %29 = vector.load %arg5[%c0_16, %c0_17] : memref<15x128xf32, #tpu.memory_space<vmem>>, vector<15x128xf32>
    %cst_18 = arith.constant dense<0.000000e+00> : vector<6x128xf32>
    %30 = tpu.matmul %28, %29, %cst_18 {dimension_numbers = #tpu.dot_dimension_numbers<[1], [0], [0], [1], [0, 0, 1, 1], [], []>} : vector<6x15xf32>, vector<15x128xf32>, vector<6x128xf32> -> vector<6x128xf32>
    %cst_19 = arith.constant dense<0xFF800000> : vector<128xf32>
    %31 = vector.multi_reduction <maximumf>, %30, %cst_19 [0] : vector<6x128xf32> to vector<128xf32>
    %32 = vector.shape_cast %31 : vector<128xf32> to vector<1x128xf32>
    %33 = vector.broadcast %32 : vector<1x128xf32> to vector<6x128xf32>
    %34 = arith.subf %30, %33 : vector<6x128xf32>
    %35 = math.exp %34 : vector<6x128xf32>
    %cst_20 = arith.constant dense<0.000000e+00> : vector<128xf32>
    %36 = vector.multi_reduction <add>, %35, %cst_20 [0] : vector<6x128xf32> to vector<128xf32>
    %37 = vector.shape_cast %36 : vector<128xf32> to vector<1x128xf32>
    %c0_21 = arith.constant 0 : index
    %c0_22 = arith.constant 0 : index
    %38 = vector.load %arg3[%c0_21, %c0_22] : memref<3x6xf32, #tpu.memory_space<vmem>>, vector<3x6xf32>
    %cst_23 = arith.constant dense<0.000000e+00> : vector<3x128xf32>
    %39 = tpu.matmul %38, %35, %cst_23 {dimension_numbers = #tpu.dot_dimension_numbers<[1], [0], [0], [1], [0, 0, 1, 1], [], []>} : vector<3x6xf32>, vector<6x128xf32>, vector<3x128xf32> -> vector<3x128xf32>
    %40 = vector.broadcast %37 : vector<1x128xf32> to vector<3x128xf32>
    %41 = arith.divf %39, %40 : vector<3x128xf32>
    %c0_24 = arith.constant 0 : index
    %c0_25 = arith.constant 0 : index
    %42 = vector.load %arg4[%c0_24, %c0_25] : memref<3x128xf32, #tpu.memory_space<vmem>>, vector<3x128xf32>
    tpu.vector_store %arg4[%c0_24, %c0_25], %41 {strides = array<i32>} : memref<3x128xf32, #tpu.memory_space<vmem>>, vector<3x128xf32>,
    return
  }
  func.func @transform_0(%arg0: i32) -> (i32, i32) {
    %c0_i32 = arith.constant 0 : i32
    %c0_i32_0 = arith.constant 0 : i32
    return %c0_i32, %arg0 : i32, i32
  }
  func.func @transform_1(%arg0: i32) -> (i32, i32) {
    %c0_i32 = arith.constant 0 : i32
    %c0_i32_0 = arith.constant 0 : i32
    %c0_i32_1 = arith.constant 0 : i32
    return %c0_i32, %c0_i32_0 : i32, i32
  }
  func.func @transform_2(%arg0: i32) -> (i32, i32) {
    %c0_i32 = arith.constant 0 : i32
    %c0_i32_0 = arith.constant 0 : i32
    %c0_i32_1 = arith.constant 0 : i32
    return %c0_i32, %c0_i32_0 : i32, i32
  }
  func.func @transform_3(%arg0: i32) -> (i32, i32) {
    %c0_i32 = arith.constant 0 : i32
    %c0_i32_0 = arith.constant 0 : i32
    return %c0_i32, %arg0 : i32, i32
  }
}

</mosaic_0001>

<llo_original>
// kernel: tpu_custom_call.1
$region0: #{tpu_custom_call.1}
  #allocation0 [shape = 'u32[]', space=smem, size = 0x4, offset = 0x4, fixed_abs, tag = 'smem constant byte address 0x4 - core index']
  #allocation1 [shape = 'u32[72,128]{1,0:T(1,128)}', space=vmem, size = 0x9000, scoped, tag = 'internal scratch']
  #allocation2 [shape = 'f32[15,128]{1,0:T(8,128)}', space=vmem, size = 0x2000, scoped, tag = 'scratch operand']
  %s0 = inlined_call_operand.hbm [shape: f32[4,128], index: 0, kind: input, shape index: {}]
  %s1 = inlined_call_operand.hbm [shape: f32[6,15], index: 1, kind: input, shape index: {}]
  %s2 = inlined_call_operand.hbm [shape: f32[3,6], index: 2, kind: input, shape index: {}]
  %s3 = inlined_call_operand.hbm [shape: f32[3,128], index: 3, kind: output, shape index: {}]
  %s4 = sld [smem:[#allocation0]]
  $region34: #{tpu_custom_call.1} parent=0
    _
  %s6 = ssub.s32 1, %s4
  %s7 = scalar_select 0, %s6, %s4
  $region1: #{tpu_custom_call.1} parent=0
    #allocation3 [shape = 'u8[2048]{0}', space=vmem, size = 0x800, scoped, tag = 'input window, operand 0, single buffered']
    #allocation4 [shape = 's32[1]{0}', space=sflag, size = 0x4, scoped, tag = 'scoped memory for tpu_custom_call.1']
    #allocation5 [shape = 's32[1]{0}', space=sflag, size = 0x4, scoped, tag = 'scoped memory for tpu_custom_call.1']
    #allocation6 [shape = 'u8[4096]{0}', space=vmem, size = 0x1000, scoped, tag = 'input window, operand 1, single buffered']
    #allocation7 [shape = 's32[1]{0}', space=sflag, size = 0x4, scoped, tag = 'scoped memory for tpu_custom_call.1']
    #allocation8 [shape = 'u8[2048]{0}', space=vmem, size = 0x800, scoped, tag = 'input window, operand 2, single buffered']
    #allocation9 [shape = 'u8[2048]{0}', space=vmem, size = 0x800, scoped, tag = 'output window, operand 0, single buffered']
    %8 = vsyncpa [#allocation4], 0
    %9 = vsyncpa [#allocation7], 0
    %10 = vsyncpa [#allocation5], 0
    // Predicated region
    $region2: #{tpu_custom_call.1} parent=1 // pred_check
      _
    $region3: #{tpu_custom_call.1} parent=1 // pred_check_branch
      %12 = sbr.rel (0) target = $region5
    $region4: #{tpu_custom_call.1} parent=1 // pred_region
      %14 = vsyncadd [#allocation4], 0
      %s16 = sshll.u32 %s0, 4
      %s17 = int_to_ptr.hbm [resolvable:$true] %s16
      %s18 = sshll.u32 [#allocation3], 4
      %s19 = int_to_ptr.vmem [resolvable:$true] %s18
      %21 = dma.hbm_to_vmem [thread:$0]  %s17, 64, %s19, [#allocation4]
    $region5: #{tpu_custom_call.1} parent=1 // pred_fallthru
      _
    // Predicated region
    $region6: #{tpu_custom_call.1} parent=1 // pred_check
      _
    $region7: #{tpu_custom_call.1} parent=1 // pred_check_branch
      %23 = sbr.rel (0) target = $region9
    $region8: #{tpu_custom_call.1} parent=1 // pred_region
      %25 = vsyncadd [#allocation7], 0
      %s27 = sshll.u32 %s1, 4
      %s28 = int_to_ptr.hbm [resolvable:$true] %s27
      %s29 = sshll.u32 [#allocation6], 4
      %s30 = int_to_ptr.vmem [resolvable:$true] %s29
      %32 = dma.hbm_to_vmem [thread:$0]  %s28, 128, %s30, [#allocation7]
    $region9: #{tpu_custom_call.1} parent=1 // pred_fallthru
      _
    // Predicated region
    $region10: #{tpu_custom_call.1} parent=1 // pred_check
      _
    $region11: #{tpu_custom_call.1} parent=1 // pred_check_branch
      %34 = sbr.rel (0) target = $region13
    $region12: #{tpu_custom_call.1} parent=1 // pred_region
      %36 = vsyncadd [#allocation7], 0
      %s38 = sshll.u32 %s2, 4
      %s39 = int_to_ptr.hbm [resolvable:$true] %s38
      %s40 = sshll.u32 [#allocation8], 4
      %s41 = int_to_ptr.vmem [resolvable:$true] %s40
      %43 = dma.hbm_to_vmem [thread:$0]  %s39, 64, %s41, [#allocation7]
    $region13: #{tpu_custom_call.1} parent=1 // pred_fallthru
      _
    // Predicated region
    $region14: #{tpu_custom_call.1} parent=1 // pred_check
      _
    $region15: #{tpu_custom_call.1} parent=1 // pred_check_branch
      %45 = sbr.rel (0) target = $region17
    $region16: #{tpu_custom_call.1} parent=1 // pred_region
      %47 = dma.done [#allocation4], 64
    $region17: #{tpu_custom_call.1} parent=1 // pred_fallthru
      _
    // Predicated region
    $region18: #{tpu_custom_call.1} parent=1 // pred_check
      _
    $region19: #{tpu_custom_call.1} parent=1 // pred_check_branch
      %49 = sbr.rel (0) target = $region21
    $region20: #{tpu_custom_call.1} parent=1 // pred_region
      %51 = dma.done [#allocation7], 128
    $region21: #{tpu_custom_call.1} parent=1 // pred_fallthru
      _
    // Predicated region
    $region22: #{tpu_custom_call.1} parent=1 // pred_check
      _
    $region23: #{tpu_custom_call.1} parent=1 // pred_check_branch
      %53 = sbr.rel (0) target = $region25
    $region24: #{tpu_custom_call.1} parent=1 // pred_region
      %55 = dma.done [#allocation7], 64
    $region25: #{tpu_custom_call.1} parent=1 // pred_fallthru
      _
    %v56 = vld [vmem:[#allocation3] sm:$0xf]
    %57 = vst [vmem:[#allocation2] sm:$0x1] 1.0
    %58 = vst [vmem:[#allocation2 + $0x1] sm:$0xf] %v56
    %v59 = vmul.f32 %v56, %v56
    %60 = vst [vmem:[#allocation2 + $0x5] sm:$0x1] %v59
    %v62 = vrot.slane %v56, 1
    %v64 = vmul.f32 %v56, %v62
    %65 = vst [vmem:[#allocation2 + $0x6] sm:$0x1] %v64
    %v66 = vrot.slane %v56, 2
    %v68 = vmul.f32 %v56, %v66
    %69 = vst [vmem:[#allocation2 + $0x7] sm:$0x1] %v68
    %v70 = vrot.slane %v56, 3
    %v72 = vmul.f32 %v56, %v70
    %73 = vst [vmem:[#allocation2 + $0x8] sm:$0x1] %v72
    %74 = vst [vmem:[#allocation2 + $0x8] sm:$0x2] %v59
    %75 = vst [vmem:[#allocation2 + $0x9] sm:$0x2] %v64
    %76 = vst [vmem:[#allocation2 + $0xa] sm:$0x2] %v68
    %77 = vst [vmem:[#allocation2 + $0xa] sm:$0x4] %v59
    %78 = vst [vmem:[#allocation2 + $0xb] sm:$0x4] %v64
    %79 = vst [vmem:[#allocation2 + $0xb] sm:$0x8] %v59
    %v80 = vld [vmem:[#allocation6] sm:$0x3f]
    %v81 = vld [vmem:[#allocation2] sm:$0xff]
    %v82 = vld [vmem:[#allocation2 + $0x8] sm:$0x7f]
    %vm83 = vcmask 121856
    %v85 = vsel %vm83, %v80, 0
    %vm87 = vcmask 1046528
    %v89 = vsel %vm87, %v82, 0
    %91 = vmatpush.msra.mxu0 0.0
    %92 = vmatpush.msra.mxu0 0.0
    %93 = vmatpush.msra.mxu0 0.0
    %94 = vmatpush.msra.mxu0 0.0
    %95 = vmatpush.msra.mxu0 0.0
    %96 = vmatpush.msra.mxu0 0.0
    %97 = vmatpush.msra.mxu0 0.0
    %98 = vmatpush.msra.mxu0 0.0
    %99 = vmatpush.msra.mxu0 0.0
    %100 = vmatpush.msra.mxu0 0.0
    %101 = vmatpush.msra.mxu0 0.0
    %102 = vmatpush.msra.mxu0 0.0
    %103 = vmatpush.msra.mxu0 0.0
    %104 = vmatpush.msra.mxu0 0.0
    %105 = vmatpush.msra.mxu0 %v89
    %106 = vmatpush.msra.mxu0 %v81
    %107 = vmatmul.f32.gmra.mxu0 %v85
    %v108 = vpop.f32.mrf.mxu0
    %v109 = vadd.f32 0.0, %v108
    %110 = vdwg.mxu0
    %vm111 = vcmask 1045504
    %v112 = vsel %vm111, %v109, -inf
    %v113 = vrot.slane %v112, 4
    %v114 = vmax.f32 %v112, %v113
    %v115 = vrot.slane %v114, 2
    %v116 = vmax.f32 %v114, %v115
    %v117 = vrot.slane %v116, 1
    %v118 = vmax.f32 %v116, %v117
    %v119 = vsub.f32 %v109, %v118
    %v120 = vmul.f32 %v119, 1.442695
    %v121 = vpow.pop %v120
    %v122 = vsel %vm111, %v121, 0.0
    %v123 = vrot.slane %v122, 4
    %v124 = vadd.f32 %v122, %v123
    %v125 = vrot.slane %v124, 2
    %v126 = vadd.f32 %v124, %v125
    %v127 = vrot.slane %v126, 1
    %v128 = vadd.f32 %v126, %v127
    %v129 = vld [vmem:[#allocation8] sm:$0x7]
    %vm130 = vcmask 48128
    %v132 = vsel %vm130, %v129, 0
    %v135 = vsel %vm111, %v121, 0
    %137 = vmatpush.msra.mxu0 0.0
    %138 = vmatpush.msra.mxu0 0.0
    %139 = vmatpush.msra.mxu0 0.0
    %140 = vmatpush.msra.mxu0 0.0
    %141 = vmatpush.msra.mxu0 0.0
    %142 = vmatpush.msra.mxu0 0.0
    %143 = vmatpush.msra.mxu0 0.0
    %144 = vmatpush.msra.mxu0 0.0
    %145 = vmatpush.msra.mxu0 0.0
    %146 = vmatpush.msra.mxu0 0.0
    %147 = vmatpush.msra.mxu0 0.0
    %148 = vmatpush.msra.mxu0 0.0
    %149 = vmatpush.msra.mxu0 0.0
    %150 = vmatpush.msra.mxu0 0.0
    %151 = vmatpush.msra.mxu0 0.0
    %152 = vmatpush.msra.mxu0 %v135
    %153 = vmatmul.f32.gmra.mxu0 %v132
    %v154 = vpop.f32.mrf.mxu0
    %v155 = vadd.f32 0.0, %v154
    %156 = vdwg.mxu0
    %v157 = vrcp.pop %v128
    %v158 = vmul.f32 %v128, %v157
    %v159 = vsub.f32 1.0, %v158
    %v160 = vmul.f32 %v157, %v159
    %v161 = vadd.f32 %v157, %v160
    %vm162 = vweird.f32 %v128
    %vm163 = vweird.f32 %v157
    %vm164 = vmor %vm162, %vm163
    %v165 = vsel %vm164, %v157, %v161
    %v166 = vand.u32 2147483647, %v128
    %vm167 = vcmp.eq.f32.partialorder %v166, 8.507059e+37
    %v168 = vand.u32 %v128, 2147483648
    %v169 = vor.u32 1.1754944e-38, %v168
    %v170 = vsel %vm167, %v169, %v165
    %v171 = vmul.f32 %v155, %v170
    %172 = vst [vmem:[#allocation9] sm:$0x7] %v171
    // Predicated region
    $region26: #{tpu_custom_call.1} parent=1 // pred_check
      _
    $region27: #{tpu_custom_call.1} parent=1 // pred_check_branch
      %174 = sbr.rel (0) target = $region29
    $region28: #{tpu_custom_call.1} parent=1 // pred_region
      %176 = vsyncadd [#allocation5], 0
      %s178 = sshll.u32 [#allocation9], 4
      %s179 = int_to_ptr.vmem [resolvable:$true] %s178
      %s180 = sshll.u32 %s3, 4
      %s181 = int_to_ptr.hbm [resolvable:$true] %s180
      %183 = dma.vmem_to_hbm [thread:$0]  %s179, 64, %s181, [#allocation5]
    $region29: #{tpu_custom_call.1} parent=1 // pred_fallthru
      _
    // Predicated region
    $region30: #{tpu_custom_call.1} parent=1 // pred_check
      _
    $region31: #{tpu_custom_call.1} parent=1 // pred_check_branch
      %185 = sbr.rel (0) target = $region33
    $region32: #{tpu_custom_call.1} parent=1 // pred_region
      %187 = dma.done [#allocation5], 64
    $region33: #{tpu_custom_call.1} parent=1 // pred_fallthru
      _
    %188 = vsyncpa [#allocation4], 1
    %189 = vsyncpa [#allocation7], 1
    %190 = vsyncpa [#allocation5], 1

</llo_original>
